<compile_context>
chip_gen: v7x
topology: tpu7x:2x2x1
jax: 0.10.0
libtpu: 0.0.40
codegen_flags: <defaults>
</compile_context>

<pallas_src>
import jax
import jax.numpy as jnp
import numpy as np
from jax.experimental import pallas as pl
from jax.experimental.pallas import tpu as pltpu

BATCH = 2
CHANNELS = 4          # torch default is 3; 4 chosen for TPU friendliness
IMG = 16
HW = IMG * IMG        # 256 -> lane dimension (multiple of 128)
TIMESTEPS = 8
HIDDEN = 32
DECOLOR_EMA = 0.9     # decolor_ema_factor
TOTAL_REMOVE = True   # decolor_total_remove


def _decolor_cumulative_kernels(channels, timesteps, ema, total_remove=True):
    """DeColorization('Constant') 1x1-conv kernels, composed cumulatively.

    K_i = ema*I + (1-ema)*J/C  for i < T-1, and the fully-averaging matrix at the
    last step when total_remove.  cum[t] = K_t @ ... @ K_0, so applying the
    forward process for steps 0..t equals one channel-mix by cum[t].
    """
    eye = jnp.eye(channels, dtype=jnp.float32)
    avg = jnp.ones((channels, channels), dtype=jnp.float32) / channels
    ks = []
    for i in range(timesteps):
        if i == timesteps - 1 and total_remove:
            ks.append(avg)                              # ema factor 0.0
        else:
            ks.append(ema * eye + (1.0 - ema) * avg)
    cum = [ks[0]]
    for i in range(1, timesteps):
        cum.append(ks[i] @ cum[-1])
    return jnp.stack(cum)                               # (T, C, C)


def diffusion_kernel(t_ref, x_ref, w1c_ref, temb_ref, w2t_ref, loss_ref):
    # Single grid step: the whole (tiny) problem is resident in VMEM.
    # Layout: images are (C, HW) with HW=256 on the lane axis.
    w2t = w2t_ref[...]                                   # (C, HIDDEN)
    total = jnp.zeros((1, 1), jnp.float32)
    for b in range(BATCH):                               # static unroll, B=2
        tb = t_ref[b]                                    # scalar t[b] from SMEM
        xb = x_ref[b]                                    # (C, HW) x_start, lane-dense
        w1t = w1c_ref[tb]                                # (HIDDEN, C) = W1^T @ cum[t[b]]
        temb = temb_ref[tb]                              # (HIDDEN, 1)

        # TODO(synk): denoise_fn is an external injected nn.Module (a UNet) in the
        # original code; here it is a synthetic per-pixel MLP with an additive time
        # embedding.  q_sample's channel mix cum[t] is folded into W1 (precomposed
        # in the wrapper), so one matmul does blur + first layer.
        h = jnp.maximum(
            jnp.dot(w1t, xb, preferred_element_type=jnp.float32) + temb, 0.0)
        x_recon = jnp.dot(w2t, h, preferred_element_type=jnp.float32)   # (C, HW)

        total = total + jnp.sum(jnp.abs(xb - x_recon), keepdims=True)

    # l1 loss: mean over all B*HW*C elements, written once.
    loss_ref[...] = total * (1.0 / float(BATCH * HW * CHANNELS))


def gaussian_diffusion_forward(x_nchw, t, cum_kernels, t_emb, w1, w2):
    b, c, h, w = x_nchw.shape
    hw = h * w
    # NCHW -> (B, C, H*W): pure reshape, no transpose; HW is the lane dim.
    x = x_nchw.reshape(b, c, hw).astype(jnp.float32)

    # Precompose decolorization into the first denoise layer: W1c[t] = W1^T @ cum[t].
    w1c = jnp.einsum('dh,tdc->thc', w1, cum_kernels).astype(jnp.float32)   # (T, HIDDEN, C)
    temb_col = jnp.transpose(t_emb, (0, 2, 1)).astype(jnp.float32)         # (T, HIDDEN, 1)
    w2t = w2.T.astype(jnp.float32)                                         # (C, HIDDEN)

    grid_spec = pltpu.PrefetchScalarGridSpec(
        num_scalar_prefetch=1,          # t lands in SMEM, indexed inside the kernel
        grid=(1,),                      # single fused step (batch unrolled in-kernel)
        in_specs=[
            pl.BlockSpec((b, c, hw), lambda i, t_ref: (0, 0, 0)),               # x
            pl.BlockSpec((TIMESTEPS, HIDDEN, c), lambda i, t_ref: (0, 0, 0)),   # W1c table
            pl.BlockSpec((TIMESTEPS, HIDDEN, 1), lambda i, t_ref: (0, 0, 0)),   # t_emb table
            pl.BlockSpec((c, HIDDEN), lambda i, t_ref: (0, 0)),                 # W2^T
        ],
        out_specs=pl.BlockSpec((1, 1), lambda i, t_ref: (0, 0)),                # scalar loss
    )
    loss = pl.pallas_call(
        diffusion_kernel,
        out_shape=jax.ShapeDtypeStruct((1, 1), jnp.float32),
        grid_spec=grid_spec,
        compiler_params=pltpu.CompilerParams(dimension_semantics=("arbitrary",)),
    )(t.astype(jnp.int32), x, w1c, temb_col, w2t)
    return loss[0, 0]


def reference_forward(x_nchw, t, cum_kernels, t_emb, w1, w2):
    b, c, h, w = x_nchw.shape
    x = jnp.transpose(x_nchw, (0, 2, 3, 1)).reshape(b, h * w, c).astype(jnp.float32)
    m = cum_kernels[t]                                      # (B, C, C)
    x_blur = jnp.einsum('bpc,bdc->bpd', x, m)
    hid = jnp.maximum(jnp.einsum('bpc,ch->bph', x_blur, w1) + t_emb[t], 0.0)
    x_recon = jnp.einsum('bph,hc->bpc', hid, w2)
    return jnp.mean(jnp.abs(x - x_recon))


if __name__ == "__main__":
    key = jax.random.PRNGKey(0)
    kx, kt, k1, k2, ke = jax.random.split(key, 5)

    # PyTorch-convention NCHW input.
    x = jax.random.normal(kx, (BATCH, CHANNELS, IMG, IMG), dtype=jnp.float32)

    # t = torch.randint(0, num_timesteps, (b,))  (int32 here; JAX x64 is off)
    t = jax.random.randint(kt, (BATCH,), 0, TIMESTEPS, dtype=jnp.int32)
    # NOTE: t_pred is also sampled in the PyTorch forward but is unused for
    # train_routine='Final', so it is omitted.

    cum_kernels = _decolor_cumulative_kernels(CHANNELS, TIMESTEPS, DECOLOR_EMA, TOTAL_REMOVE)

    # Deterministic synthetic denoise_fn parameters.
    w1 = jax.random.normal(k1, (CHANNELS, HIDDEN), dtype=jnp.float32) * 0.1
    w2 = jax.random.normal(k2, (HIDDEN, CHANNELS), dtype=jnp.float32) * 0.1
    t_emb = jax.random.normal(ke, (TIMESTEPS, 1, HIDDEN), dtype=jnp.float32) * 0.1

    loss = gaussian_diffusion_forward(x, t, cum_kernels, t_emb, w1, w2)
    loss = jax.block_until_ready(loss)

    ref = reference_forward(x, t, cum_kernels, t_emb, w1, w2)
    np.testing.assert_allclose(np.asarray(loss), np.asarray(ref), rtol=1e-4, atol=1e-5)
    print("KERNEL_OK")
</pallas_src>

<mosaic_0001>
module attributes {stable_mosaic.version = 11 : i64} {
  func.func @diffusion_kernel(%arg0: i32, %arg1: memref<2xi32, #tpu.memory_space<smem>>, %arg2: memref<2x4x256xf32, #tpu.memory_space<vmem>>, %arg3: memref<8x32x4xf32, #tpu.memory_space<vmem>>, %arg4: memref<8x32x1xf32, #tpu.memory_space<vmem>>, %arg5: memref<4x32xf32, #tpu.memory_space<vmem>>, %arg6: memref<1x1xf32, #tpu.memory_space<vmem>>) attributes {dimension_semantics = [#tpu.dimension_semantics<arbitrary>], iteration_bounds = array<i64: 1>, scalar_prefetch = 1 : i64, scratch_operands = 0 : i64, tpu.core_type = #tpu.core_type<tc>, window_params = [{pipeline_mode = #tpu.pipeline_mode<synchronous>, transform_indices = @transform_0, window_bounds = array<i64: 2, 4, 256>}, {pipeline_mode = #tpu.pipeline_mode<synchronous>, transform_indices = @transform_1, window_bounds = array<i64: 8, 32, 4>}, {pipeline_mode = #tpu.pipeline_mode<synchronous>, transform_indices = @transform_2, window_bounds = array<i64: 8, 32, 1>}, {pipeline_mode = #tpu.pipeline_mode<synchronous>, transform_indices = @transform_3, window_bounds = array<i64: 4, 32>}, {pipeline_mode = #tpu.pipeline_mode<synchronous>, transform_indices = @transform_4, window_bounds = array<i64: 1, 1>}]} {
    %c0 = arith.constant 0 : index
    %c0_0 = arith.constant 0 : index
    %0 = vector.load %arg5[%c0, %c0_0] : memref<4x32xf32, #tpu.memory_space<vmem>>, vector<4x32xf32>
    %cst = arith.constant 0.000000e+00 : f32
    %1 = vector.broadcast %cst : f32 to vector<1x1xf32>
    %c0_1 = arith.constant 0 : index
    %2 = memref.load %arg1[%c0_1] : memref<2xi32, #tpu.memory_space<smem>>
    %c0_2 = arith.constant 0 : index
    %c0_3 = arith.constant 0 : index
    %c0_4 = arith.constant 0 : index
    %3 = vector.load %arg2[%c0_2, %c0_3, %c0_4] : memref<2x4x256xf32, #tpu.memory_space<vmem>>, vector<1x4x256xf32>
    %4 = vector.shape_cast %3 : vector<1x4x256xf32> to vector<4x256xf32>
    %5 = arith.index_cast %2 : i32 to index
    %c0_5 = arith.constant 0 : index
    %c0_6 = arith.constant 0 : index
    %6 = vector.load %arg3[%5, %c0_5, %c0_6] : memref<8x32x4xf32, #tpu.memory_space<vmem>>, vector<1x32x4xf32>
    %7 = vector.shape_cast %6 : vector<1x32x4xf32> to vector<32x4xf32>
    %8 = arith.index_cast %2 : i32 to index
    %c0_7 = arith.constant 0 : index
    %c0_8 = arith.constant 0 : index
    %9 = vector.load %arg4[%8, %c0_7, %c0_8] : memref<8x32x1xf32, #tpu.memory_space<vmem>>, vector<1x32x1xf32>
    %10 = vector.shape_cast %9 : vector<1x32x1xf32> to vector<32x1xf32>
    %cst_9 = arith.constant dense<0.000000e+00> : vector<32x256xf32>
    %11 = tpu.matmul %7, %4, %cst_9 {dimension_numbers = #tpu.dot_dimension_numbers<[1], [0], [0], [1], [0, 0, 1, 1], [], []>} : vector<32x4xf32>, vector<4x256xf32>, vector<32x256xf32> -> vector<32x256xf32>
    %12 = vector.broadcast %10 : vector<32x1xf32> to vector<32x256xf32>
    %13 = arith.addf %11, %12 : vector<32x256xf32>
    %cst_10 = arith.constant 0.000000e+00 : f32
    %14 = vector.broadcast %cst_10 : f32 to vector<32x256xf32>
    %15 = arith.maximumf %13, %14 : vector<32x256xf32>
    %cst_11 = arith.constant dense<0.000000e+00> : vector<4x256xf32>
    %16 = tpu.matmul %0, %15, %cst_11 {dimension_numbers = #tpu.dot_dimension_numbers<[1], [0], [0], [1], [0, 0, 1, 1], [], []>} : vector<4x32xf32>, vector<32x256xf32>, vector<4x256xf32> -> vector<4x256xf32>
    %17 = arith.subf %4, %16 : vector<4x256xf32>
    %18 = math.absf %17 : vector<4x256xf32>
    %19 = vector.shape_cast %18 : vector<4x256xf32> to vector<1x4x256xf32>
    %cst_12 = arith.constant dense<0.000000e+00> : vector<1xf32>
    %20 = vector.multi_reduction <add>, %19, %cst_12 [1, 2] : vector<1x4x256xf32> to vector<1xf32>
    %21 = vector.shape_cast %20 : vector<1xf32> to vector<1x1x1xf32>
    %22 = vector.extract %21[0, 0, 0] : f32 from vector<1x1x1xf32>
    %23 = vector.broadcast %22 : f32 to vector<1x1xf32>
    %24 = arith.addf %1, %23 : vector<1x1xf32>
    %c1 = arith.constant 1 : index
    %25 = memref.load %arg1[%c1] : memref<2xi32, #tpu.memory_space<smem>>
    %c1_13 = arith.constant 1 : index
    %c0_14 = arith.constant 0 : index
    %c0_15 = arith.constant 0 : index
    %26 = vector.load %arg2[%c1_13, %c0_14, %c0_15] : memref<2x4x256xf32, #tpu.memory_space<vmem>>, vector<1x4x256xf32>
    %27 = vector.shape_cast %26 : vector<1x4x256xf32> to vector<4x256xf32>
    %28 = arith.index_cast %25 : i32 to index
    %c0_16 = arith.constant 0 : index
    %c0_17 = arith.constant 0 : index
    %29 = vector.load %arg3[%28, %c0_16, %c0_17] : memref<8x32x4xf32, #tpu.memory_space<vmem>>, vector<1x32x4xf32>
    %30 = vector.shape_cast %29 : vector<1x32x4xf32> to vector<32x4xf32>
    %31 = arith.index_cast %25 : i32 to index
    %c0_18 = arith.constant 0 : index
    %c0_19 = arith.constant 0 : index
    %32 = vector.load %arg4[%31, %c0_18, %c0_19] : memref<8x32x1xf32, #tpu.memory_space<vmem>>, vector<1x32x1xf32>
    %33 = vector.shape_cast %32 : vector<1x32x1xf32> to vector<32x1xf32>
    %cst_20 = arith.constant dense<0.000000e+00> : vector<32x256xf32>
    %34 = tpu.matmul %30, %27, %cst_20 {dimension_numbers = #tpu.dot_dimension_numbers<[1], [0], [0], [1], [0, 0, 1, 1], [], []>} : vector<32x4xf32>, vector<4x256xf32>, vector<32x256xf32> -> vector<32x256xf32>
    %35 = vector.broadcast %33 : vector<32x1xf32> to vector<32x256xf32>
    %36 = arith.addf %34, %35 : vector<32x256xf32>
    %cst_21 = arith.constant 0.000000e+00 : f32
    %37 = vector.broadcast %cst_21 : f32 to vector<32x256xf32>
    %38 = arith.maximumf %36, %37 : vector<32x256xf32>
    %cst_22 = arith.constant dense<0.000000e+00> : vector<4x256xf32>
    %39 = tpu.matmul %0, %38, %cst_22 {dimension_numbers = #tpu.dot_dimension_numbers<[1], [0], [0], [1], [0, 0, 1, 1], [], []>} : vector<4x32xf32>, vector<32x256xf32>, vector<4x256xf32> -> vector<4x256xf32>
    %40 = arith.subf %27, %39 : vector<4x256xf32>
    %41 = math.absf %40 : vector<4x256xf32>
    %42 = vector.shape_cast %41 : vector<4x256xf32> to vector<1x4x256xf32>
    %cst_23 = arith.constant dense<0.000000e+00> : vector<1xf32>
    %43 = vector.multi_reduction <add>, %42, %cst_23 [1, 2] : vector<1x4x256xf32> to vector<1xf32>
    %44 = vector.shape_cast %43 : vector<1xf32> to vector<1x1x1xf32>
    %45 = vector.extract %44[0, 0, 0] : f32 from vector<1x1x1xf32>
    %46 = vector.broadcast %45 : f32 to vector<1x1xf32>
    %47 = arith.addf %24, %46 : vector<1x1xf32>
    %cst_24 = arith.constant 4.8828125E-4 : f32
    %48 = vector.broadcast %cst_24 : f32 to vector<1x1xf32>
    %49 = arith.mulf %47, %48 : vector<1x1xf32>
    %c0_25 = arith.constant 0 : index
    %c0_26 = arith.constant 0 : index
    %50 = vector.load %arg6[%c0_25, %c0_26] : memref<1x1xf32, #tpu.memory_space<vmem>>, vector<1x1xf32>
    tpu.vector_store %arg6[%c0_25, %c0_26], %49 {strides = array<i32>} : memref<1x1xf32, #tpu.memory_space<vmem>>, vector<1x1xf32>,
    return
  }
  func.func @transform_0(%arg0: i32, %arg1: memref<2xi32, #tpu.memory_space<smem>>) -> (i32, i32, i32) {
    %c0_i32 = arith.constant 0 : i32
    %c0_i32_0 = arith.constant 0 : i32
    %c0_i32_1 = arith.constant 0 : i32
    %c0_i32_2 = arith.constant 0 : i32
    return %c0_i32, %c0_i32_0, %c0_i32_1 : i32, i32, i32
  }
  func.func @transform_1(%arg0: i32, %arg1: memref<2xi32, #tpu.memory_space<smem>>) -> (i32, i32, i32) {
    %c0_i32 = arith.constant 0 : i32
    %c0_i32_0 = arith.constant 0 : i32
    %c0_i32_1 = arith.constant 0 : i32
    %c0_i32_2 = arith.constant 0 : i32
    return %c0_i32, %c0_i32_0, %c0_i32_1 : i32, i32, i32
  }
  func.func @transform_2(%arg0: i32, %arg1: memref<2xi32, #tpu.memory_space<smem>>) -> (i32, i32, i32) {
    %c0_i32 = arith.constant 0 : i32
    %c0_i32_0 = arith.constant 0 : i32
    %c0_i32_1 = arith.constant 0 : i32
    %c0_i32_2 = arith.constant 0 : i32
    return %c0_i32, %c0_i32_0, %c0_i32_1 : i32, i32, i32
  }
  func.func @transform_3(%arg0: i32, %arg1: memref<2xi32, #tpu.memory_space<smem>>) -> (i32, i32) {
    %c0_i32 = arith.constant 0 : i32
    %c0_i32_0 = arith.constant 0 : i32
    %c0_i32_1 = arith.constant 0 : i32
    return %c0_i32, %c0_i32_0 : i32, i32
  }
  func.func @transform_4(%arg0: i32, %arg1: memref<2xi32, #tpu.memory_space<smem>>) -> (i32, i32) {
    %c0_i32 = arith.constant 0 : i32
    %c0_i32_0 = arith.constant 0 : i32
    %c0_i32_1 = arith.constant 0 : i32
    return %c0_i32, %c0_i32_0 : i32, i32
  }
}

</mosaic_0001>

<llo_original>
// kernel: tpu_custom_call.1
$region0: #{tpu_custom_call.1}
  #allocation0 [shape = 'u32[]', space=smem, size = 0x4, offset = 0x4, fixed_abs, tag = 'smem constant byte address 0x4 - core index']
  #allocation1 [shape = 'u32[144,128]{1,0:T(1,128)}', space=vmem, size = 0x12000, scoped, tag = 'internal scratch']
  #allocation2 [shape = 's32[1]{0}', space=sflag, size = 0x4, scoped, tag = 'scoped memory for tpu_custom_call.1']
  #allocation3 [shape = 'u8[512]{0}', space=smem, size = 0x200, scoped, tag = 'prefetched SMEM operand 0']
  %s0 = inlined_call_operand.vmem [shape: s32[2], index: 0, kind: input, shape index: {}]
  %s1 = inlined_call_operand.vmem [shape: f32[2,4,256], index: 1, kind: input, shape index: {}]
  %s2 = inlined_call_operand.vmem [shape: f32[8,32,4], index: 2, kind: input, shape index: {}]
  %s3 = inlined_call_operand.vmem [shape: f32[8,32,1], index: 3, kind: input, shape index: {}]
  %s4 = inlined_call_operand.vmem [shape: f32[4,32], index: 4, kind: input, shape index: {}]
  %s5 = inlined_call_operand.hbm [shape: f32[1,1], index: 5, kind: output, shape index: {}]
  %s6 = sld [smem:[#allocation0]]
  $region26: #{tpu_custom_call.1} parent=0
    _
  %s8 = ssub.s32 1, %s6
  %s9 = scalar_select 0, %s8, %s6
  %s10 = sshll.u32 %s0, 4
  %s11 = int_to_ptr.vmem [resolvable:$true] %s10
  %13 = dma.vmem_to_smem %s11, 16, [#allocation3], [#allocation2]
  %14 = dma.done [#allocation2], 16
  %15 = sfence
  $region1: #{tpu_custom_call.1} parent=0
    #allocation4 [shape = 'u8[512]{0}', space=vmem, size = 0x400, scoped, tag = 'output window, operand 0, single buffered']
    #allocation5 [shape = 's32[1]{0}', space=sflag, size = 0x4, scoped, tag = 'scoped memory for tpu_custom_call.1']
    %16 = vsyncpa [#allocation5], 0
    // Predicated region
    $region2: #{tpu_custom_call.1} parent=1 // pred_check
      _
    $region3: #{tpu_custom_call.1} parent=1 // pred_check_branch
      %18 = sbr.rel (0) target = $region5
    $region4: #{tpu_custom_call.1} parent=1 // pred_region
      _
    $region5: #{tpu_custom_call.1} parent=1 // pred_fallthru
      _
    // Predicated region
    $region6: #{tpu_custom_call.1} parent=1 // pred_check
      _
    $region7: #{tpu_custom_call.1} parent=1 // pred_check_branch
      %20 = sbr.rel (0) target = $region9
    $region8: #{tpu_custom_call.1} parent=1 // pred_region
      _
    $region9: #{tpu_custom_call.1} parent=1 // pred_fallthru
      _
    // Predicated region
    $region10: #{tpu_custom_call.1} parent=1 // pred_check
      _
    $region11: #{tpu_custom_call.1} parent=1 // pred_check_branch
      %22 = sbr.rel (0) target = $region13
    $region12: #{tpu_custom_call.1} parent=1 // pred_region
      _
    $region13: #{tpu_custom_call.1} parent=1 // pred_fallthru
      _
    // Predicated region
    $region14: #{tpu_custom_call.1} parent=1 // pred_check
      _
    $region15: #{tpu_custom_call.1} parent=1 // pred_check_branch
      %24 = sbr.rel (0) target = $region17
    $region16: #{tpu_custom_call.1} parent=1 // pred_region
      _
    $region17: #{tpu_custom_call.1} parent=1 // pred_fallthru
      _
    %v25 = vld [vmem:[%s4] sm:$0xf]
    %s26 = sld [smem:[#allocation3]]
    %v27 = vld [vmem:[%s1] sm:$0xff]
    %s28 = smul.u32 %s26, 32
    %s29 = scalar_lea.vmem %s2, %s28
    %v30 = vld [vmem:[%s29] sm:$0xff]
    %v31 = vld [vmem:[%s29 + $0x8] sm:$0xff]
    %v32 = vld [vmem:[%s29 + $0x10] sm:$0xff]
    %v33 = vld [vmem:[%s29 + $0x18] sm:$0xff]
    %s34 = scalar_lea.vmem %s3, %s28
    %v35 = vld [vmem:[%s34] sm:$0xff]
    %v36 = vld [vmem:[%s34 + $0x8] sm:$0xff]
    %v37 = vld [vmem:[%s34 + $0x10] sm:$0xff]
    %v38 = vld [vmem:[%s34 + $0x18] sm:$0xff]
    %40 = vset.pattern.permute.xlu0 0
    %41 = vperm.xlu0 %40, %v35
    %v42 = vpop.permute.xlu0 %41
    %45 = vset.pattern.permute.xlu0 0
    %46 = vperm.xlu0 %45, %v36
    %v47 = vpop.permute.xlu0 %46
    %50 = vset.pattern.permute.xlu0 0
    %51 = vperm.xlu0 %50, %v37
    %v52 = vpop.permute.xlu0 %51
    %55 = vset.pattern.permute.xlu0 0
    %56 = vperm.xlu0 %55, %v38
    %v57 = vpop.permute.xlu0 %56
    %v60 = vcombine.high %v27, %v27
    %vm61 = vcmask 31744
    %v63 = vsel %vm61, %v30, 0
    %v66 = vsel %vm61, %v31, 0
    %v69 = vsel %vm61, %v32, 0
    %v72 = vsel %vm61, %v33, 0
    %vm74 = vcmask 1043456
    %v75 = vsel %vm74, %v27, 0
    %v77 = vsel %vm74, %v60, 0
    %79 = vmatprep.subr.mxu0 %v77
    %80 = vmatpush1.msra.mxu0 %v75
    %81 = vmatprep.subr.mxu0 0.0
    %82 = vmatpush1.msra.mxu0 0.0
    %83 = vmatprep.subr.mxu0 0.0
    %84 = vmatpush1.msra.mxu0 0.0
    %85 = vmatprep.subr.mxu0 0.0
    %86 = vmatpush1.msra.mxu0 0.0
    %87 = vmatprep.subr.mxu0 0.0
    %88 = vmatpush1.msra.mxu0 0.0
    %89 = vmatprep.subr.mxu0 0.0
    %90 = vmatpush1.msra.mxu0 0.0
    %91 = vmatprep.subr.mxu0 0.0
    %92 = vmatpush1.msra.mxu0 0.0
    %93 = vmatprep.subr.mxu0 0.0
    %94 = vmatpush1.msra.mxu0 0.0
    %95 = vmatprep.subr.mxu0 0.0
    %96 = vmatpush1.msra.mxu0 0.0
    %97 = vmatprep.subr.mxu0 0.0
    %98 = vmatpush1.msra.mxu0 0.0
    %99 = vmatprep.subr.mxu0 0.0
    %100 = vmatpush1.msra.mxu0 0.0
    %101 = vmatprep.subr.mxu0 0.0
    %102 = vmatpush1.msra.mxu0 0.0
    %103 = vmatprep.subr.mxu0 0.0
    %104 = vmatpush1.msra.mxu0 0.0
    %105 = vmatprep.subr.mxu0 0.0
    %106 = vmatpush1.msra.mxu0 0.0
    %107 = vmatprep.subr.mxu0 0.0
    %108 = vmatpush1.msra.mxu0 0.0
    %109 = vmatprep.subr.mxu0 0.0
    %110 = vmatpush1.msra.mxu0 0.0
    %111 = vmatprep.subr.mxu0 0.0
    %112 = vmatpush1.msra.mxu0 0.0
    %113 = vmatprep.subr.mxu0 0.0
    %114 = vmatpush1.msra.mxu0 0.0
    %115 = vmatprep.subr.mxu0 0.0
    %116 = vmatpush1.msra.mxu0 0.0
    %117 = vmatprep.subr.mxu0 0.0
    %118 = vmatpush1.msra.mxu0 0.0
    %119 = vmatprep.subr.mxu0 0.0
    %120 = vmatpush1.msra.mxu0 0.0
    %121 = vmatprep.subr.mxu0 0.0
    %122 = vmatpush1.msra.mxu0 0.0
    %123 = vmatprep.subr.mxu0 0.0
    %124 = vmatpush1.msra.mxu0 0.0
    %125 = vmatprep.subr.mxu0 0.0
    %126 = vmatpush1.msra.mxu0 0.0
    %127 = vmatprep.subr.mxu0 0.0
    %128 = vmatpush1.msra.mxu0 0.0
    %129 = vmatprep.subr.mxu0 0.0
    %130 = vmatpush1.msra.mxu0 0.0
    %131 = vmatprep.subr.mxu0 0.0
    %132 = vmatpush1.msra.mxu0 0.0
    %133 = vmatprep.subr.mxu0 0.0
    %134 = vmatpush1.msra.mxu0 0.0
    %135 = vmatprep.subr.mxu0 0.0
    %136 = vmatpush1.msra.mxu0 0.0
    %137 = vmatprep.subr.mxu0 0.0
    %138 = vmatpush1.msra.mxu0 0.0
    %139 = vmatprep.subr.mxu0 0.0
    %140 = vmatpush1.msra.mxu0 0.0
    %141 = vmatprep.subr.mxu0 0.0
    %142 = vmatpush1.msra.mxu0 0.0
    %143 = vmatprep.mubr.f32.mxu0 0.0
    %144 = vmatmul.mubr.f32.gmra.mrb[0].mxu0 %v63
    %v145 = vpop.f32.mrb[0].mxu0
    %v146 = vadd.f32 %v42, %v145
    %v147 = vpop.f32.mrb[0].mxu0
    %v148 = vadd.f32 %v42, %v147
    %149 = vmatprep.mubr.f32.mxu0 0.0
    %150 = vmatmul.mubr.f32.gmra.mrb[0].mxu0 %v66
    %v151 = vpop.f32.mrb[0].mxu0
    %v152 = vadd.f32 %v47, %v151
    %v153 = vpop.f32.mrb[0].mxu0
    %v154 = vadd.f32 %v47, %v153
    %155 = vmatprep.mubr.f32.mxu0 0.0
    %156 = vmatmul.mubr.f32.gmra.mrb[0].mxu0 %v69
    %v157 = vpop.f32.mrb[0].mxu0
    %v158 = vadd.f32 %v52, %v157
    %v159 = vpop.f32.mrb[0].mxu0
    %v160 = vadd.f32 %v52, %v159
    %161 = vmatprep.mubr.f32.mxu0 0.0
    %162 = vmatmul.mubr.f32.gmra.mrb[0].mxu0 %v72
    %v163 = vpop.f32.mrb[0].mxu0
    %v164 = vadd.f32 %v57, %v163
    %v165 = vpop.f32.mrb[0].mxu0
    %v166 = vadd.f32 %v57, %v165
    %167 = vdwg.mxu0
    %v168 = vmax.f32 %v146, 0.0
    %v169 = vmax.f32 %v148, 0.0
    %v170 = vmax.f32 %v152, 0.0
    %v171 = vmax.f32 %v154, 0.0
    %v172 = vmax.f32 %v158, 0.0
    %v173 = vmax.f32 %v160, 0.0
    %v174 = vmax.f32 %v164, 0.0
    %v175 = vmax.f32 %v166, 0.0
    %vm176 = vcmask 261120
    %v178 = vsel %vm176, %v25, 0
    %180 = vmatprep.subr.mxu0 %v169
    %181 = vmatpush1.msra.mxu0 %v168
    %182 = vmatprep.subr.mxu0 %v171
    %183 = vmatpush1.msra.mxu0 %v170
    %184 = vmatprep.subr.mxu0 %v173
    %185 = vmatpush1.msra.mxu0 %v172
    %186 = vmatprep.subr.mxu0 %v175
    %187 = vmatpush1.msra.mxu0 %v174
    %188 = vmatprep.subr.mxu0 0.0
    %189 = vmatpush1.msra.mxu0 0.0
    %190 = vmatprep.subr.mxu0 0.0
    %191 = vmatpush1.msra.mxu0 0.0
    %192 = vmatprep.subr.mxu0 0.0
    %193 = vmatpush1.msra.mxu0 0.0
    %194 = vmatprep.subr.mxu0 0.0
    %195 = vmatpush1.msra.mxu0 0.0
    %196 = vmatprep.subr.mxu0 0.0
    %197 = vmatpush1.msra.mxu0 0.0
    %198 = vmatprep.subr.mxu0 0.0
    %199 = vmatpush1.msra.mxu0 0.0
    %200 = vmatprep.subr.mxu0 0.0
    %201 = vmatpush1.msra.mxu0 0.0
    %202 = vmatprep.subr.mxu0 0.0
    %203 = vmatpush1.msra.mxu0 0.0
    %204 = vmatprep.subr.mxu0 0.0
    %205 = vmatpush1.msra.mxu0 0.0
    %206 = vmatprep.subr.mxu0 0.0
    %207 = vmatpush1.msra.mxu0 0.0
    %208 = vmatprep.subr.mxu0 0.0
    %209 = vmatpush1.msra.mxu0 0.0
    %210 = vmatprep.subr.mxu0 0.0
    %211 = vmatpush1.msra.mxu0 0.0
    %212 = vmatprep.subr.mxu0 0.0
    %213 = vmatpush1.msra.mxu0 0.0
    %214 = vmatprep.subr.mxu0 0.0
    %215 = vmatpush1.msra.mxu0 0.0
    %216 = vmatprep.subr.mxu0 0.0
    %217 = vmatpush1.msra.mxu0 0.0
    %218 = vmatprep.subr.mxu0 0.0
    %219 = vmatpush1.msra.mxu0 0.0
    %220 = vmatprep.subr.mxu0 0.0
    %221 = vmatpush1.msra.mxu0 0.0
    %222 = vmatprep.subr.mxu0 0.0
    %223 = vmatpush1.msra.mxu0 0.0
    %224 = vmatprep.subr.mxu0 0.0
    %225 = vmatpush1.msra.mxu0 0.0
    %226 = vmatprep.subr.mxu0 0.0
    %227 = vmatpush1.msra.mxu0 0.0
    %228 = vmatprep.subr.mxu0 0.0
    %229 = vmatpush1.msra.mxu0 0.0
    %230 = vmatprep.subr.mxu0 0.0
    %231 = vmatpush1.msra.mxu0 0.0
    %232 = vmatprep.subr.mxu0 0.0
    %233 = vmatpush1.msra.mxu0 0.0
    %234 = vmatprep.subr.mxu0 0.0
    %235 = vmatpush1.msra.mxu0 0.0
    %236 = vmatprep.subr.mxu0 0.0
    %237 = vmatpush1.msra.mxu0 0.0
    %238 = vmatprep.subr.mxu0 0.0
    %239 = vmatpush1.msra.mxu0 0.0
    %240 = vmatprep.subr.mxu0 0.0
    %241 = vmatpush1.msra.mxu0 0.0
    %242 = vmatprep.subr.mxu0 0.0
    %243 = vmatpush1.msra.mxu0 0.0
    %244 = vmatprep.mubr.f32.mxu0 0.0
    %245 = vmatmul.mubr.f32.gmra.mrb[0].mxu0 %v178
    %v246 = vpop.f32.mrb[0].mxu0
    %v247 = vadd.f32 0.0, %v246
    %v248 = vpop.f32.mrb[0].mxu0
    %v249 = vadd.f32 0.0, %v248
    %250 = vdwg.mxu0
    %v253 = vcombine.low %v247, %v249
    %v255 = vsub.f32 %v27, %v253
    %v256 = vand.u32 2147483647, %v255
    %v258 = vcombine.high %v256, %v256
    %v260 = vsel %vm74, %v256, 0.0
    %v261 = vsel %vm74, %v258, 0.0
    %v262 = vadd.f32 %v260, %v261
    %263 = vadd.xlane.f32.xlu0 %v262
    %v264 = vpop.xlane.xlu0 %263
    %v265 = vrot.slane %v264, 4
    %v266 = vadd.f32 %v264, %v265
    %v267 = vrot.slane %v266, 2
    %v268 = vadd.f32 %v266, %v267
    %v269 = vrot.slane %v268, 1
    %v270 = vadd.f32 %v268, %v269
    %s271 = vtos %v270
    %v272 = vstv %s271
    %v273 = vadd.f32 %v272, 0.0
    %s274 = sld [smem:[#allocation3 + $0x1]]
    %s275 = scalar_lea.vmem %s1, 8
    %v276 = vld [vmem:[%s275] sm:$0xff]
    %s277 = smul.u32 %s274, 32
    %s278 = scalar_lea.vmem %s2, %s277
    %v279 = vld [vmem:[%s278] sm:$0xff]
    %v280 = vld [vmem:[%s278 + $0x8] sm:$0xff]
    %v281 = vld [vmem:[%s278 + $0x10] sm:$0xff]
    %v282 = vld [vmem:[%s278 + $0x18] sm:$0xff]
    %s283 = scalar_lea.vmem %s3, %s277
    %v284 = vld [vmem:[%s283] sm:$0xff]
    %v285 = vld [vmem:[%s283 + $0x8] sm:$0xff]
    %v286 = vld [vmem:[%s283 + $0x10] sm:$0xff]
    %v287 = vld [vmem:[%s283 + $0x18] sm:$0xff]
    %289 = vset.pattern.permute.xlu0 0
    %290 = vperm.xlu0 %289, %v284
    %v291 = vpop.permute.xlu0 %290
    %294 = vset.pattern.permute.xlu0 0
    %295 = vperm.xlu0 %294, %v285
    %v296 = vpop.permute.xlu0 %295
    %299 = vset.pattern.permute.xlu0 0
    %300 = vperm.xlu0 %299, %v286
    %v301 = vpop.permute.xlu0 %300
    %304 = vset.pattern.permute.xlu0 0
    %305 = vperm.xlu0 %304, %v287
    %v306 = vpop.permute.xlu0 %305
    %v309 = vcombine.high %v276, %v276
    %v311 = vsel %vm61, %v279, 0
    %v314 = vsel %vm61, %v280, 0
    %v317 = vsel %vm61, %v281, 0
    %v320 = vsel %vm61, %v282, 0
    %v322 = vsel %vm74, %v276, 0
    %v324 = vsel %vm74, %v309, 0
    %326 = vmatprep.subr.mxu0 %v324
    %327 = vmatpush1.msra.mxu0 %v322
    %328 = vmatprep.subr.mxu0 0.0
    %329 = vmatpush1.msra.mxu0 0.0
    %330 = vmatprep.subr.mxu0 0.0
    %331 = vmatpush1.msra.mxu0 0.0
    %332 = vmatprep.subr.mxu0 0.0
    %333 = vmatpush1.msra.mxu0 0.0
    %334 = vmatprep.subr.mxu0 0.0
    %335 = vmatpush1.msra.mxu0 0.0
    %336 = vmatprep.subr.mxu0 0.0
    %337 = vmatpush1.msra.mxu0 0.0
    %338 = vmatprep.subr.mxu0 0.0
    %339 = vmatpush1.msra.mxu0 0.0
    %340 = vmatprep.subr.mxu0 0.0
    %341 = vmatpush1.msra.mxu0 0.0
    %342 = vmatprep.subr.mxu0 0.0
    %343 = vmatpush1.msra.mxu0 0.0
    %344 = vmatprep.subr.mxu0 0.0
    %345 = vmatpush1.msra.mxu0 0.0
    %346 = vmatprep.subr.mxu0 0.0
    %347 = vmatpush1.msra.mxu0 0.0
    %348 = vmatprep.subr.mxu0 0.0
    %349 = vmatpush1.msra.mxu0 0.0
    %350 = vmatprep.subr.mxu0 0.0
    %351 = vmatpush1.msra.mxu0 0.0
    %352 = vmatprep.subr.mxu0 0.0
    %353 = vmatpush1.msra.mxu0 0.0
    %354 = vmatprep.subr.mxu0 0.0
    %355 = vmatpush1.msra.mxu0 0.0
    %356 = vmatprep.subr.mxu0 0.0
    %357 = vmatpush1.msra.mxu0 0.0
    %358 = vmatprep.subr.mxu0 0.0
    %359 = vmatpush1.msra.mxu0 0.0
    %360 = vmatprep.subr.mxu0 0.0
    %361 = vmatpush1.msra.mxu0 0.0
    %362 = vmatprep.subr.mxu0 0.0
    %363 = vmatpush1.msra.mxu0 0.0
    %364 = vmatprep.subr.mxu0 0.0
    %365 = vmatpush1.msra.mxu0 0.0
    %366 = vmatprep.subr.mxu0 0.0
    %367 = vmatpush1.msra.mxu0 0.0
    %368 = vmatprep.subr.mxu0 0.0
    %369 = vmatpush1.msra.mxu0 0.0
    %370 = vmatprep.subr.mxu0 0.0
    %371 = vmatpush1.msra.mxu0 0.0
    %372 = vmatprep.subr.mxu0 0.0
    %373 = vmatpush1.msra.mxu0 0.0
    %374 = vmatprep.subr.mxu0 0.0
    %375 = vmatpush1.msra.mxu0 0.0
    %376 = vmatprep.subr.mxu0 0.0
    %377 = vmatpush1.msra.mxu0 0.0
    %378 = vmatprep.subr.mxu0 0.0
    %379 = vmatpush1.msra.mxu0 0.0
    %380 = vmatprep.subr.mxu0 0.0
    %381 = vmatpush1.msra.mxu0 0.0
    %382 = vmatprep.subr.mxu0 0.0
    %383 = vmatpush1.msra.mxu0 0.0
    %384 = vmatprep.subr.mxu0 0.0
    %385 = vmatpush1.msra.mxu0 0.0
    %386 = vmatprep.subr.mxu0 0.0
    %387 = vmatpush1.msra.mxu0 0.0
    %388 = vmatprep.subr.mxu0 0.0
    %389 = vmatpush1.msra.mxu0 0.0
    %390 = vmatprep.mubr.f32.mxu0 0.0
    %391 = vmatmul.mubr.f32.gmra.mrb[0].mxu0 %v311
    %v392 = vpop.f32.mrb[0].mxu0
    %v393 = vadd.f32 %v291, %v392
    %v394 = vpop.f32.mrb[0].mxu0
    %v395 = vadd.f32 %v291, %v394
    %396 = vmatprep.mubr.f32.mxu0 0.0
    %397 = vmatmul.mubr.f32.gmra.mrb[0].mxu0 %v314
    %v398 = vpop.f32.mrb[0].mxu0
    %v399 = vadd.f32 %v296, %v398
    %v400 = vpop.f32.mrb[0].mxu0
    %v401 = vadd.f32 %v296, %v400
    %402 = vmatprep.mubr.f32.mxu0 0.0
    %403 = vmatmul.mubr.f32.gmra.mrb[0].mxu0 %v317
    %v404 = vpop.f32.mrb[0].mxu0
    %v405 = vadd.f32 %v301, %v404
    %v406 = vpop.f32.mrb[0].mxu0
    %v407 = vadd.f32 %v301, %v406
    %408 = vmatprep.mubr.f32.mxu0 0.0
    %409 = vmatmul.mubr.f32.gmra.mrb[0].mxu0 %v320
    %v410 = vpop.f32.mrb[0].mxu0
    %v411 = vadd.f32 %v306, %v410
    %v412 = vpop.f32.mrb[0].mxu0
    %v413 = vadd.f32 %v306, %v412
    %414 = vdwg.mxu0
    %v415 = vmax.f32 %v393, 0.0
    %v416 = vmax.f32 %v395, 0.0
    %v417 = vmax.f32 %v399, 0.0
    %v418 = vmax.f32 %v401, 0.0
    %v419 = vmax.f32 %v405, 0.0
    %v420 = vmax.f32 %v407, 0.0
    %v421 = vmax.f32 %v411, 0.0
    %v422 = vmax.f32 %v413, 0.0
    %423 = vmatprep.subr.mxu0 %v416
    %424 = vmatpush1.msra.mxu0 %v415
    %425 = vmatprep.subr.mxu0 %v418
    %426 = vmatpush1.msra.mxu0 %v417
    %427 = vmatprep.subr.mxu0 %v420
    %428 = vmatpush1.msra.mxu0 %v419
    %429 = vmatprep.subr.mxu0 %v422
    %430 = vmatpush1.msra.mxu0 %v421
    %431 = vmatprep.subr.mxu0 0.0
    %432 = vmatpush1.msra.mxu0 0.0
    %433 = vmatprep.subr.mxu0 0.0
    %434 = vmatpush1.msra.mxu0 0.0
    %435 = vmatprep.subr.mxu0 0.0
    %436 = vmatpush1.msra.mxu0 0.0
    %437 = vmatprep.subr.mxu0 0.0
    %438 = vmatpush1.msra.mxu0 0.0
    %439 = vmatprep.subr.mxu0 0.0
    %440 = vmatpush1.msra.mxu0 0.0
    %441 = vmatprep.subr.mxu0 0.0
    %442 = vmatpush1.msra.mxu0 0.0
    %443 = vmatprep.subr.mxu0 0.0
    %444 = vmatpush1.msra.mxu0 0.0
    %445 = vmatprep.subr.mxu0 0.0
    %446 = vmatpush1.msra.mxu0 0.0
    %447 = vmatprep.subr.mxu0 0.0
    %448 = vmatpush1.msra.mxu0 0.0
    %449 = vmatprep.subr.mxu0 0.0
    %450 = vmatpush1.msra.mxu0 0.0
    %451 = vmatprep.subr.mxu0 0.0
    %452 = vmatpush1.msra.mxu0 0.0
    %453 = vmatprep.subr.mxu0 0.0
    %454 = vmatpush1.msra.mxu0 0.0
    %455 = vmatprep.subr.mxu0 0.0
    %456 = vmatpush1.msra.mxu0 0.0
    %457 = vmatprep.subr.mxu0 0.0
    %458 = vmatpush1.msra.mxu0 0.0
    %459 = vmatprep.subr.mxu0 0.0
    %460 = vmatpush1.msra.mxu0 0.0
    %461 = vmatprep.subr.mxu0 0.0
    %462 = vmatpush1.msra.mxu0 0.0
    %463 = vmatprep.subr.mxu0 0.0
    %464 = vmatpush1.msra.mxu0 0.0
    %465 = vmatprep.subr.mxu0 0.0
    %466 = vmatpush1.msra.mxu0 0.0
    %467 = vmatprep.subr.mxu0 0.0
    %468 = vmatpush1.msra.mxu0 0.0
    %469 = vmatprep.subr.mxu0 0.0
    %470 = vmatpush1.msra.mxu0 0.0
    %471 = vmatprep.subr.mxu0 0.0
    %472 = vmatpush1.msra.mxu0 0.0
    %473 = vmatprep.subr.mxu0 0.0
    %474 = vmatpush1.msra.mxu0 0.0
    %475 = vmatprep.subr.mxu0 0.0
    %476 = vmatpush1.msra.mxu0 0.0
    %477 = vmatprep.subr.mxu0 0.0
    %478 = vmatpush1.msra.mxu0 0.0
    %479 = vmatprep.subr.mxu0 0.0
    %480 = vmatpush1.msra.mxu0 0.0
    %481 = vmatprep.subr.mxu0 0.0
    %482 = vmatpush1.msra.mxu0 0.0
    %483 = vmatprep.subr.mxu0 0.0
    %484 = vmatpush1.msra.mxu0 0.0
    %485 = vmatprep.subr.mxu0 0.0
    %486 = vmatpush1.msra.mxu0 0.0
    %487 = vmatprep.mubr.f32.mxu0 0.0
    %488 = vmatmul.mubr.f32.gmra.mrb[0].mxu0 %v178
    %v489 = vpop.f32.mrb[0].mxu0
    %v490 = vadd.f32 0.0, %v489
    %v491 = vpop.f32.mrb[0].mxu0
    %v492 = vadd.f32 0.0, %v491
    %493 = vdwg.mxu0
    %v496 = vcombine.low %v490, %v492
    %v498 = vsub.f32 %v276, %v496
    %v499 = vand.u32 2147483647, %v498
    %v501 = vcombine.high %v499, %v499
    %v503 = vsel %vm74, %v499, 0.0
    %v504 = vsel %vm74, %v501, 0.0
    %v505 = vadd.f32 %v503, %v504
    %506 = vadd.xlane.f32.xlu0 %v505
    %v507 = vpop.xlane.xlu0 %506
    %v508 = vrot.slane %v507, 4
    %v509 = vadd.f32 %v507, %v508
    %v510 = vrot.slane %v509, 2
    %v511 = vadd.f32 %v509, %v510
    %v512 = vrot.slane %v511, 1
    %v513 = vadd.f32 %v511, %v512
    %s514 = vtos %v513
    %v515 = vstv %s514
    %v516 = vadd.f32 %v273, %v515
    %v517 = vmul.f32 %v516, 0.00048828125
    %vm518 = vcmask 0
    %519 = vst.msk [vmem:[#allocation4] sm:$0x1] %vm518, %v517
    // Predicated region
    $region18: #{tpu_custom_call.1} parent=1 // pred_check
      _
    $region19: #{tpu_custom_call.1} parent=1 // pred_check_branch
      %521 = sbr.rel (0) target = $region21
    $region20: #{tpu_custom_call.1} parent=1 // pred_region
      %s523 = ssub.s32 16, 16
      %524 = vsyncadd [#allocation5], %s523
      %s526 = sshll.u32 [#allocation4], 4
      %s527 = int_to_ptr.vmem [resolvable:$true] %s526
      %529 = dma.vmem_to_hbm [thread:$0]  %s527, 16, %s5, [#allocation5]
    $region21: #{tpu_custom_call.1} parent=1 // pred_fallthru
      _
    // Predicated region
    $region22: #{tpu_custom_call.1} parent=1 // pred_check
      _
    $region23: #{tpu_custom_call.1} parent=1 // pred_check_branch
      %531 = sbr.rel (0) target = $region25
    $region24: #{tpu_custom_call.1} parent=1 // pred_region
      %532 = dma.done [#allocation5], 16
    $region25: #{tpu_custom_call.1} parent=1 // pred_fallthru
      _
    %533 = vsyncpa [#allocation5], 1

</llo_original>
